<compile_context>
chip_gen: v6e
topology: v6e:2x2x1
jax: 0.10.0
libtpu: 0.0.40
codegen_flags: <defaults>
</compile_context>

<pallas_src>
import functools

import jax
import jax.numpy as jnp
import numpy as np
from jax.experimental import pallas as pl
from jax.experimental.pallas import tpu as pltpu

_WORK_BUDGET_BYTES = 16 * 1024 * 1024   # per-grid-step VMEM working-set target
_VMEM_LIMIT_BYTES = 40 * 1024 * 1024    # raise scoped VMEM (defaults 16/32 MiB)


def _cdiv(a, b):
    return -(-a // b)


def _round_up(a, b):
    return _cdiv(a, b) * b


def _ldam_kernel(x_ref, tgt_ref, m_ref, out_ref, m_sc, l_sc, t_sc, *,
                 s, num_classes, batch, block_b, block_c, num_c_tiles,
                 mask_cols):
    bi = pl.program_id(0)        # batch tile (parallel)
    ci = pl.program_id(1)        # class tile (arbitrary, innermost)

    @pl.when(ci == 0)
    def _():
        m_sc[...] = jnp.full_like(m_sc, -1e30)   # running max
        l_sc[...] = jnp.zeros_like(l_sc)          # running sum of exp
        t_sc[...] = jnp.zeros_like(t_sc)          # raw target logit

    x = x_ref[...].astype(jnp.float32)            # (TB, TC) logits, f32 compute
    tgt = tgt_ref[...]                            # (TB, 1) int32 targets
    sm = m_ref[...]                               # (1, TC) margins, pre-scaled by s

    cols = jax.lax.broadcasted_iota(jnp.int32, x.shape, 1)
    if num_c_tiles > 1:
        cols = cols + ci * block_c
    is_tgt = cols == tgt                          # bool one-hot mask (no float mul)

    sx = s * x
    scaled = jnp.where(is_tgt, sx - sm, sx)       # s*x - s*m[target] on target col
    if mask_cols:
        # Only needed when the (tiled) class axis over-runs C.
        scaled = jnp.where(cols < num_classes, scaled, -1e30)

    blk_max = jnp.max(scaled, axis=1, keepdims=True)                      # (TB,1)
    tgt_raw = jnp.sum(jnp.where(is_tgt, scaled, 0.0), axis=1, keepdims=True)

    # Online (streaming) logsumexp combine across class tiles.
    m_prev = m_sc[...]
    m_new = jnp.maximum(m_prev, blk_max)
    alpha = jnp.exp(m_prev - m_new)
    l_sc[...] = alpha * l_sc[...] + jnp.sum(jnp.exp(scaled - m_new), axis=1,
                                            keepdims=True)
    m_sc[...] = m_new
    t_sc[...] = t_sc[...] + tgt_raw

    @pl.when(ci == pl.num_programs(1) - 1)
    def _():
        # per-sample NLL = logsumexp(scaled) - scaled[target]
        per_sample = m_sc[...] + jnp.log(l_sc[...]) - t_sc[...]           # (TB,1)
        rows = bi * block_b + jax.lax.broadcasted_iota(jnp.int32,
                                                       per_sample.shape, 0)
        partial = jnp.sum(jnp.where(rows < batch, per_sample, 0.0))
        # Full-vreg (8,128) unmasked store of the broadcast partial.
        out_ref[...] = jnp.broadcast_to(partial, out_ref.shape)
    # TODO(synk): per-class `weight` re-weighting not implemented (module is
    # constructed with weight=None, matching the default forward semantics).


def _choose_tiles(B, C, in_bytes, work_budget):
    """Pick (batch tile, class tile) from dtype / C / VMEM working budget."""
    per_elem = 2 * in_bytes + 20          # double-buffered input + ~5 f32 temps
    b8 = _round_up(B, 8)

    tb_full = (work_budget // (C * per_elem)) // 8 * 8
    if tb_full >= 8:
        tc = C                            # whole class axis resident (full-dim block)
        tb = min(tb_full, 1024, b8)
    else:
        # Large C: tile the class axis (multiple of 128) -> online logsumexp.
        tb = min(b8, 128)
        tc = (work_budget // (tb * per_elem)) // 128 * 128
        tc = max(128, min(tc, _round_up(C, 128)))
        if tc >= C:
            tc = C

    # Give the "parallel" batch axis >= 2 tiles so megacore/v7x can shard it.
    if _cdiv(B, tb) < 2 and b8 >= 16:
        tb = _round_up(_cdiv(B, 2), 8)
    return tb, tc


def ldam_loss(x, target, cls_num_list, max_m=0.5, s=30.0,
              work_budget_bytes=_WORK_BUDGET_BYTES):
    """LDAM loss. x: (B, C) float32/bf16 logits, target: (B,) int class ids."""
    B, C = x.shape
    in_bytes = x.dtype.itemsize

    cls_num = np.asarray(cls_num_list, dtype=np.float64)
    m_list = 1.0 / np.sqrt(np.sqrt(cls_num))
    m_list = m_list * (max_m / np.max(m_list))

    tb, tc = _choose_tiles(B, C, in_bytes, int(work_budget_bytes))
    num_b_tiles = _cdiv(B, tb)
    num_c_tiles = _cdiv(C, tc)
    mask_cols = (C % tc) != 0
    c_total = num_c_tiles * tc

    # Margins: pre-scaled by s on the host, padded (tiny, built host-side).
    m_host = np.zeros((1, c_total), dtype=np.float32)
    m_host[0, :C] = (float(s) * m_list).astype(np.float32)
    m_arr = jnp.asarray(m_host)

    tgt2d = target.reshape(B, 1).astype(jnp.int32)

    kernel = functools.partial(
        _ldam_kernel, s=float(s), num_classes=int(C), batch=int(B),
        block_b=int(tb), block_c=int(tc), num_c_tiles=int(num_c_tiles),
        mask_cols=bool(mask_cols))

    cost = pl.CostEstimate(
        flops=8 * B * C,
        transcendentals=B * C,
        bytes_accessed=B * C * in_bytes + B * 4 + c_total * 4
        + num_b_tiles * 8 * 128 * 4)

    partials = pl.pallas_call(
        kernel,
        out_shape=jax.ShapeDtypeStruct((num_b_tiles, 8, 128), jnp.float32),
        grid=(num_b_tiles, num_c_tiles),
        in_specs=[
            pl.BlockSpec((tb, tc), lambda i, j: (i, j)),    # logits tile
            pl.BlockSpec((tb, 1), lambda i, j: (i, 0)),     # targets tile
            pl.BlockSpec((1, tc), lambda i, j: (0, j)),     # margins tile
        ],
        out_specs=pl.BlockSpec((1, 8, 128), lambda i, j: (i, 0, 0)),
        scratch_shapes=[
            pltpu.VMEM((tb, 1), jnp.float32),   # running max
            pltpu.VMEM((tb, 1), jnp.float32),   # running sum of exp
            pltpu.VMEM((tb, 1), jnp.float32),   # raw target logit
        ],
        compiler_params=pltpu.CompilerParams(
            dimension_semantics=("parallel", "arbitrary"),
            vmem_limit_bytes=_VMEM_LIMIT_BYTES),
        cost_estimate=cost,
    )(x, tgt2d, m_arr)

    # Finish the mean (F.cross_entropy with weight=None) in the wrapper.
    return jnp.sum(partials[:, 0, 0]) / B


def _ldam_loss_ref(x, target, cls_num_list, max_m=0.5, s=30.0):
    """Plain-JAX reference matching the PyTorch module (weight=None)."""
    B, C = x.shape
    cls_num = np.asarray(cls_num_list, dtype=np.float64)
    m_list = 1.0 / np.sqrt(np.sqrt(cls_num))
    m_list = m_list * (max_m / np.max(m_list))
    m_list = jnp.asarray(m_list, dtype=jnp.float32)

    onehot = jax.nn.one_hot(target, C, dtype=jnp.float32)
    batch_m = (onehot @ m_list).reshape(B, 1)
    out = jnp.where(onehot > 0, x.astype(jnp.float32) - batch_m,
                    x.astype(jnp.float32))
    logp = jax.nn.log_softmax(s * out, axis=1)
    return -jnp.mean(jnp.sum(onehot * logp, axis=1))


if __name__ == "__main__":
    key = jax.random.PRNGKey(0)

    def run_case(B, C, **kw):
        cls_num_list = [int(v) for v in np.linspace(1000, 10, C)]
        kx, kt = jax.random.split(jax.random.fold_in(key, 1000 * B + C))
        x = jax.random.normal(kx, (B, C), dtype=jnp.float32)
        target = jax.random.randint(kt, (B,), 0, C, dtype=jnp.int32)
        loss = jax.block_until_ready(ldam_loss(x, target, cls_num_list, **kw))
        ref = _ldam_loss_ref(x, target, cls_num_list)
        assert np.allclose(np.asarray(loss), np.asarray(ref),
                           rtol=1e-5, atol=1e-5), (B, C, loss, ref)

    # Primary small case consistent with the module spec.
    run_case(8, 16)
    # Ragged batch tile + class dim not a multiple of 128 (full-dim block path).
    run_case(10, 200)
    # Force the class-tiled / online-logsumexp path with a tiny VMEM budget.
    run_case(12, 300, work_budget_bytes=64 * 1024)

    print("KERNEL_OK")
</pallas_src>

<mosaic_0001>
module attributes {stable_mosaic.version = 11 : i64} {
  func.func @_ldam_kernel(%arg0: i32, %arg1: i32, %arg2: memref<8x16xf32, #tpu.memory_space<vmem>>, %arg3: memref<8x1xi32, #tpu.memory_space<vmem>>, %arg4: memref<1x16xf32, #tpu.memory_space<vmem>>, %arg5: memref<1x8x128xf32, #tpu.memory_space<vmem>>, %arg6: memref<8x1xf32, #tpu.memory_space<vmem>>, %arg7: memref<8x1xf32, #tpu.memory_space<vmem>>, %arg8: memref<8x1xf32, #tpu.memory_space<vmem>>) attributes {dimension_semantics = [#tpu.dimension_semantics<parallel>, #tpu.dimension_semantics<arbitrary>], iteration_bounds = array<i64: 1, 1>, scalar_prefetch = 0 : i64, scratch_operands = 3 : i64, tpu.core_type = #tpu.core_type<tc>, window_params = [{transform_indices = @transform_0, window_bounds = array<i64: 8, 16>}, {transform_indices = @transform_1, window_bounds = array<i64: 8, 1>}, {transform_indices = @transform_2, window_bounds = array<i64: 1, 16>}, {transform_indices = @transform_3, window_bounds = array<i64: 1, 8, 128>}]} {
    %c0_i32 = arith.constant 0 : i32
    %0 = arith.cmpi eq, %arg1, %c0_i32 : i32
    %1 = arith.extui %0 : i1 to i32
    %c0_i32_0 = arith.constant 0 : i32
    %2 = arith.cmpi ne, %1, %c0_i32_0 : i32
    scf.if %2 {
      %cst_24 = arith.constant -1.000000e+30 : f32
      %40 = vector.broadcast %cst_24 : f32 to vector<8x1xf32>
      %c0_25 = arith.constant 0 : index
      %c0_26 = arith.constant 0 : index
      %41 = vector.load %arg6[%c0_25, %c0_26] : memref<8x1xf32, #tpu.memory_space<vmem>>, vector<8x1xf32>
      tpu.vector_store %arg6[%c0_25, %c0_26], %40 {strides = array<i32>} : memref<8x1xf32, #tpu.memory_space<vmem>>, vector<8x1xf32>,
      %cst_27 = arith.constant 0.000000e+00 : f32
      %42 = vector.broadcast %cst_27 : f32 to vector<8x1xf32>
      %c0_28 = arith.constant 0 : index
      %c0_29 = arith.constant 0 : index
      %43 = vector.load %arg7[%c0_28, %c0_29] : memref<8x1xf32, #tpu.memory_space<vmem>>, vector<8x1xf32>
      tpu.vector_store %arg7[%c0_28, %c0_29], %42 {strides = array<i32>} : memref<8x1xf32, #tpu.memory_space<vmem>>, vector<8x1xf32>,
      %cst_30 = arith.constant 0.000000e+00 : f32
      %44 = vector.broadcast %cst_30 : f32 to vector<8x1xf32>
      %c0_31 = arith.constant 0 : index
      %c0_32 = arith.constant 0 : index
      %45 = vector.load %arg8[%c0_31, %c0_32] : memref<8x1xf32, #tpu.memory_space<vmem>>, vector<8x1xf32>
      tpu.vector_store %arg8[%c0_31, %c0_32], %44 {strides = array<i32>} : memref<8x1xf32, #tpu.memory_space<vmem>>, vector<8x1xf32>,
    } else {
    }
    %c0 = arith.constant 0 : index
    %c0_1 = arith.constant 0 : index
    %3 = vector.load %arg2[%c0, %c0_1] : memref<8x16xf32, #tpu.memory_space<vmem>>, vector<8x16xf32>
    %c0_2 = arith.constant 0 : index
    %c0_3 = arith.constant 0 : index
    %4 = vector.load %arg3[%c0_2, %c0_3] : memref<8x1xi32, #tpu.memory_space<vmem>>, vector<8x1xi32>
    %c0_4 = arith.constant 0 : index
    %c0_5 = arith.constant 0 : index
    %5 = vector.load %arg4[%c0_4, %c0_5] : memref<1x16xf32, #tpu.memory_space<vmem>>, vector<1x16xf32>
    %6 = tpu.iota {dimensions = array<i32: 1>} : vector<8x16xi32>
    %7 = vector.broadcast %4 : vector<8x1xi32> to vector<8x16xi32>
    %8 = arith.cmpi eq, %6, %7 : vector<8x16xi32>
    %cst = arith.constant 3.000000e+01 : f32
    %9 = vector.broadcast %cst : f32 to vector<8x16xf32>
    %10 = arith.mulf %9, %3 : vector<8x16xf32>
    %11 = vector.broadcast %5 : vector<1x16xf32> to vector<8x16xf32>
    %12 = arith.subf %10, %11 : vector<8x16xf32>
    %13 = arith.select %8, %12, %10 : vector<8x16xi1>, vector<8x16xf32>
    %cst_6 = arith.constant dense<0xFF800000> : vector<8xf32>
    %14 = vector.multi_reduction <maximumf>, %13, %cst_6 [1] : vector<8x16xf32> to vector<8xf32>
    %15 = vector.shape_cast %14 : vector<8xf32> to vector<8x1xf32>
    %cst_7 = arith.constant 0.000000e+00 : f32
    %16 = vector.broadcast %cst_7 : f32 to vector<8x16xf32>
    %17 = arith.select %8, %13, %16 : vector<8x16xi1>, vector<8x16xf32>
    %cst_8 = arith.constant dense<0.000000e+00> : vector<8xf32>
    %18 = vector.multi_reduction <add>, %17, %cst_8 [1] : vector<8x16xf32> to vector<8xf32>
    %19 = vector.shape_cast %18 : vector<8xf32> to vector<8x1xf32>
    %c0_9 = arith.constant 0 : index
    %c0_10 = arith.constant 0 : index
    %20 = vector.load %arg6[%c0_9, %c0_10] : memref<8x1xf32, #tpu.memory_space<vmem>>, vector<8x1xf32>
    %21 = arith.maximumf %20, %15 : vector<8x1xf32>
    %22 = arith.subf %20, %21 : vector<8x1xf32>
    %23 = math.exp %22 : vector<8x1xf32>
    %c0_11 = arith.constant 0 : index
    %c0_12 = arith.constant 0 : index
    %24 = vector.load %arg7[%c0_11, %c0_12] : memref<8x1xf32, #tpu.memory_space<vmem>>, vector<8x1xf32>
    %25 = arith.mulf %23, %24 : vector<8x1xf32>
    %26 = vector.broadcast %21 : vector<8x1xf32> to vector<8x16xf32>
    %27 = arith.subf %13, %26 : vector<8x16xf32>
    %28 = math.exp %27 : vector<8x16xf32>
    %cst_13 = arith.constant dense<0.000000e+00> : vector<8xf32>
    %29 = vector.multi_reduction <add>, %28, %cst_13 [1] : vector<8x16xf32> to vector<8xf32>
    %30 = vector.shape_cast %29 : vector<8xf32> to vector<8x1xf32>
    %31 = arith.addf %25, %30 : vector<8x1xf32>
    %c0_14 = arith.constant 0 : index
    %c0_15 = arith.constant 0 : index
    %32 = vector.load %arg7[%c0_14, %c0_15] : memref<8x1xf32, #tpu.memory_space<vmem>>, vector<8x1xf32>
    tpu.vector_store %arg7[%c0_14, %c0_15], %31 {strides = array<i32>} : memref<8x1xf32, #tpu.memory_space<vmem>>, vector<8x1xf32>,
    %c0_16 = arith.constant 0 : index
    %c0_17 = arith.constant 0 : index
    %33 = vector.load %arg6[%c0_16, %c0_17] : memref<8x1xf32, #tpu.memory_space<vmem>>, vector<8x1xf32>
    tpu.vector_store %arg6[%c0_16, %c0_17], %21 {strides = array<i32>} : memref<8x1xf32, #tpu.memory_space<vmem>>, vector<8x1xf32>,
    %c0_18 = arith.constant 0 : index
    %c0_19 = arith.constant 0 : index
    %34 = vector.load %arg8[%c0_18, %c0_19] : memref<8x1xf32, #tpu.memory_space<vmem>>, vector<8x1xf32>
    %35 = arith.addf %34, %19 : vector<8x1xf32>
    %c0_20 = arith.constant 0 : index
    %c0_21 = arith.constant 0 : index
    %36 = vector.load %arg8[%c0_20, %c0_21] : memref<8x1xf32, #tpu.memory_space<vmem>>, vector<8x1xf32>
    tpu.vector_store %arg8[%c0_20, %c0_21], %35 {strides = array<i32>} : memref<8x1xf32, #tpu.memory_space<vmem>>, vector<8x1xf32>,
    %c0_i32_22 = arith.constant 0 : i32
    %37 = arith.cmpi eq, %arg1, %c0_i32_22 : i32
    %38 = arith.extui %37 : i1 to i32
    %c0_i32_23 = arith.constant 0 : i32
    %39 = arith.cmpi ne, %38, %c0_i32_23 : i32
    scf.if %39 {
      %c0_24 = arith.constant 0 : index
      %c0_25 = arith.constant 0 : index
      %40 = vector.load %arg6[%c0_24, %c0_25] : memref<8x1xf32, #tpu.memory_space<vmem>>, vector<8x1xf32>
      %c0_26 = arith.constant 0 : index
      %c0_27 = arith.constant 0 : index
      %41 = vector.load %arg7[%c0_26, %c0_27] : memref<8x1xf32, #tpu.memory_space<vmem>>, vector<8x1xf32>
      %42 = math.log %41 : vector<8x1xf32>
      %43 = arith.addf %40, %42 : vector<8x1xf32>
      %c0_28 = arith.constant 0 : index
      %c0_29 = arith.constant 0 : index
      %44 = vector.load %arg8[%c0_28, %c0_29] : memref<8x1xf32, #tpu.memory_space<vmem>>, vector<8x1xf32>
      %45 = arith.subf %43, %44 : vector<8x1xf32>
      %c8_i32 = arith.constant 8 : i32
      %46 = arith.muli %arg0, %c8_i32 : i32
      %47 = tpu.iota {dimensions = array<i32: 0>} : vector<8x1xi32>
      %48 = vector.broadcast %46 : i32 to vector<8x1xi32>
      %49 = arith.addi %48, %47 : vector<8x1xi32>
      %c8_i32_30 = arith.constant 8 : i32
      %50 = vector.broadcast %c8_i32_30 : i32 to vector<8x1xi32>
      %51 = arith.cmpi slt, %49, %50 : vector<8x1xi32>
      %cst_31 = arith.constant 0.000000e+00 : f32
      %52 = vector.broadcast %cst_31 : f32 to vector<8x1xf32>
      %53 = arith.select %51, %45, %52 : vector<8x1xi1>, vector<8x1xf32>
      %54 = vector.shape_cast %53 : vector<8x1xf32> to vector<1x8x1xf32>
      %cst_32 = arith.constant dense<0.000000e+00> : vector<1xf32>
      %55 = vector.multi_reduction <add>, %54, %cst_32 [1, 2] : vector<1x8x1xf32> to vector<1xf32>
      %56 = vector.shape_cast %55 : vector<1xf32> to vector<1x1x1xf32>
      %57 = vector.extract %56[0, 0, 0] : f32 from vector<1x1x1xf32>
      %58 = vector.broadcast %57 : f32 to vector<1x8x128xf32>
      %c0_33 = arith.constant 0 : index
      %c0_34 = arith.constant 0 : index
      %c0_35 = arith.constant 0 : index
      %59 = vector.load %arg5[%c0_33, %c0_34, %c0_35] : memref<1x8x128xf32, #tpu.memory_space<vmem>>, vector<1x8x128xf32>
      tpu.vector_store %arg5[%c0_33, %c0_34, %c0_35], %58 {strides = array<i32>} : memref<1x8x128xf32, #tpu.memory_space<vmem>>, vector<1x8x128xf32>,
    } else {
    }
    return
  }
  func.func @transform_0(%arg0: i32, %arg1: i32) -> (i32, i32) {
    %c0_i32 = arith.constant 0 : i32
    return %arg0, %arg1 : i32, i32
  }
  func.func @transform_1(%arg0: i32, %arg1: i32) -> (i32, i32) {
    %c0_i32 = arith.constant 0 : i32
    %c0_i32_0 = arith.constant 0 : i32
    return %arg0, %c0_i32 : i32, i32
  }
  func.func @transform_2(%arg0: i32, %arg1: i32) -> (i32, i32) {
    %c0_i32 = arith.constant 0 : i32
    %c0_i32_0 = arith.constant 0 : i32
    return %c0_i32, %arg1 : i32, i32
  }
  func.func @transform_3(%arg0: i32, %arg1: i32) -> (i32, i32, i32) {
    %c0_i32 = arith.constant 0 : i32
    %c0_i32_0 = arith.constant 0 : i32
    %c0_i32_1 = arith.constant 0 : i32
    return %arg0, %c0_i32, %c0_i32_0 : i32, i32, i32
  }
}

</mosaic_0001>

<llo_original>
// kernel: tpu_custom_call.1
$region0: #{tpu_custom_call.1}
  #allocation0 [shape = 'u32[]', space=smem, size = 0x4, offset = 0x4, fixed_abs, tag = 'smem constant byte address 0x4 - core index']
  #allocation1 [shape = 'u32[144,128]{1,0:T(1,128)}', space=vmem, size = 0x12000, scoped, tag = 'internal scratch']
  #allocation2 [shape = 'f32[8,1]{1,0:T(8,128)}', space=vmem, size = 0x1000, scoped, tag = 'scratch operand']
  #allocation3 [shape = 'f32[8,1]{1,0:T(8,128)}', space=vmem, size = 0x1000, scoped, tag = 'scratch operand']
  #allocation4 [shape = 'f32[8,1]{1,0:T(8,128)}', space=vmem, size = 0x1000, scoped, tag = 'scratch operand']
  %s0 = inlined_call_operand.vmem [shape: f32[8,16], index: 0, kind: input, shape index: {}]
  %s1 = inlined_call_operand.vmem [shape: s32[8,1], index: 1, kind: input, shape index: {}]
  %s2 = inlined_call_operand.vmem [shape: f32[1,16], index: 2, kind: input, shape index: {}]
  %s3 = inlined_call_operand.hbm [shape: f32[1,8,128], index: 3, kind: output, shape index: {}]
  %s4 = sld [smem:[#allocation0]]
  $region30: #{tpu_custom_call.1} parent=0
    _
  %s6 = ssub.s32 1, %s4
  %s7 = scalar_select 0, %s6, %s4
  $region1: #{tpu_custom_call.1} parent=0
    #allocation5 [shape = 'u8[4096]{0}', space=vmem, size = 0x1000, scoped, tag = 'output window, operand 0, single buffered']
    #allocation6 [shape = 's32[1]{0}', space=sflag, size = 0x4, scoped, tag = 'scoped memory for tpu_custom_call.1']
    %8 = vsyncpa [#allocation6], 0
    // Predicated region
    $region2: #{tpu_custom_call.1} parent=1 // pred_check
      _
    $region3: #{tpu_custom_call.1} parent=1 // pred_check_branch
      %10 = sbr.rel (0) target = $region5
    $region4: #{tpu_custom_call.1} parent=1 // pred_region
      _
    $region5: #{tpu_custom_call.1} parent=1 // pred_fallthru
      _
    // Predicated region
    $region6: #{tpu_custom_call.1} parent=1 // pred_check
      _
    $region7: #{tpu_custom_call.1} parent=1 // pred_check_branch
      %12 = sbr.rel (0) target = $region9
    $region8: #{tpu_custom_call.1} parent=1 // pred_region
      _
    $region9: #{tpu_custom_call.1} parent=1 // pred_fallthru
      _
    // Predicated region
    $region10: #{tpu_custom_call.1} parent=1 // pred_check
      _
    $region11: #{tpu_custom_call.1} parent=1 // pred_check_branch
      %14 = sbr.rel (0) target = $region13
    $region12: #{tpu_custom_call.1} parent=1 // pred_region
      _
    $region13: #{tpu_custom_call.1} parent=1 // pred_fallthru
      _
    %p15 = scmp.eq.s32.totalorder 0, 0
    // Predicated region
    $region14: #{tpu_custom_call.1} parent=1 // pred_check
      %p16 = pneg %p15
    $region15: #{tpu_custom_call.1} parent=1 // pred_check_branch
      %18 = sbr.rel (%p16) target = $region17
    $region16: #{tpu_custom_call.1} parent=1 // pred_region
      %vm19 = vcmask 7168
      %20 = vst.msk [vmem:[#allocation2] sm:$0xff] %vm19, -1e+30
      %21 = vst.msk [vmem:[#allocation3] sm:$0xff] %vm19, 0.0
      %22 = vst.msk [vmem:[#allocation4] sm:$0xff] %vm19, 0.0
    $region17: #{tpu_custom_call.1} parent=1 // pred_fallthru
      _
    %v23 = vld [vmem:[%s0] sm:$0xff]
    %v24 = vld [vmem:[%s1] sm:$0xff]
    %v25 = vld [vmem:[%s2] sm:$0x1]
    %v26 = vlaneseq
    %v27 = vand.u32 %v26, 127
    %28 = vset.pattern.permute.xlu0 0
    %29 = vperm.xlu0 %28, %v24
    %v30 = vpop.permute.xlu0 %29
    %vm31 = vcmp.eq.s32.totalorder %v27, %v30
    %v32 = vmul.f32 %v23, 30.0
    %v34 = vlaneseq
    %v35 = vshrl.u32 %v34, 7
    %v36 = vsub.s32 0, %v35
    %v37 = vrot.slane %v25, %v36
    %v39 = vsub.f32 %v32, %v37
    %v40 = vsel %vm31, %v39, %v32
    %vm41 = vcmask 130048
    %v42 = vsel %vm41, %v40, -inf
    %43 = vmax.xlane.f32.xlu0 %v42
    %v44 = vpop.xlane.xlu0 %43
    %v45 = vsel %vm31, %v39, 0.0
    %v46 = vsel %vm41, %v45, 0.0
    %47 = vadd.xlane.f32.xlu0 %v46
    %v48 = vpop.xlane.xlu0 %47
    %v49 = vld [vmem:[#allocation2] sm:$0xff]
    %v50 = vmax.f32 %v49, %v44
    %v51 = vsub.f32 %v49, %v50
    %v52 = vmul.f32 %v51, 1.442695
    %v53 = vpow.pop %v52
    %v54 = vld [vmem:[#allocation3] sm:$0xff]
    %v55 = vmul.f32 %v53, %v54
    %57 = vset.pattern.permute.xlu0 0
    %58 = vperm.xlu0 %57, %v50
    %v59 = vpop.permute.xlu0 %58
    %v61 = vsub.f32 %v40, %v59
    %v62 = vmul.f32 %v61, 1.442695
    %v63 = vpow.pop %v62
    %v64 = vsel %vm41, %v63, 0.0
    %65 = vadd.xlane.f32.xlu0 %v64
    %v66 = vpop.xlane.xlu0 %65
    %v67 = vadd.f32 %v55, %v66
    %vm68 = vcmask 7168
    %69 = vst.msk [vmem:[#allocation3] sm:$0xff] %vm68, %v67
    %70 = vst.msk [vmem:[#allocation2] sm:$0xff] %vm68, %v50
    %v71 = vld [vmem:[#allocation4] sm:$0xff]
    %v72 = vadd.f32 %v71, %v48
    %73 = vst.msk [vmem:[#allocation4] sm:$0xff] %vm68, %v72
    // Predicated region
    $region18: #{tpu_custom_call.1} parent=1 // pred_check
      %p74 = pneg %p15
    $region19: #{tpu_custom_call.1} parent=1 // pred_check_branch
      %76 = sbr.rel (%p74) target = $region21
    $region20: #{tpu_custom_call.1} parent=1 // pred_region
      %v77 = vld [vmem:[#allocation2] sm:$0xff]
      %v78 = vld [vmem:[#allocation3] sm:$0xff]
      %v79 = vlog2.pop %v78
      %v80 = vmul.f32 %v79, 0.6931472
      %v81 = vadd.f32 %v77, %v80
      %v82 = vld [vmem:[#allocation4] sm:$0xff]
      %v83 = vsub.f32 %v81, %v82
      %s84 = smul.u32 0, 8
      %v85 = vlaneseq
      %v86 = vshrl.u32 %v85, 7
      %v87 = vstv %s84
      %v88 = vadd.s32 %v87, %v86
      %vm89 = vcmp.lt.s32.totalorder %v88, 8
      %v90 = vsel %vm89, %v83, 0.0
      %v91 = vsel %vm68, %v90, 0.0
      %92 = vadd.xlane.f32.xlu0 %v91
      %v93 = vpop.xlane.xlu0 %92
      %v94 = vrot.slane %v93, 4
      %v95 = vadd.f32 %v93, %v94
      %v96 = vrot.slane %v95, 2
      %v97 = vadd.f32 %v95, %v96
      %v98 = vrot.slane %v97, 1
      %v99 = vadd.f32 %v97, %v98
      %s100 = vtos %v99
      %v101 = vstv %s100
      %102 = vst [vmem:[#allocation5] sm:$0xff] %v101
    $region21: #{tpu_custom_call.1} parent=1 // pred_fallthru
      _
    // Predicated region
    $region22: #{tpu_custom_call.1} parent=1 // pred_check
      _
    $region23: #{tpu_custom_call.1} parent=1 // pred_check_branch
      %104 = sbr.rel (0) target = $region25
    $region24: #{tpu_custom_call.1} parent=1 // pred_region
      %s106 = ssub.s32 128, 128
      %107 = vsyncadd [#allocation6], %s106
      %s109 = sshll.u32 [#allocation5], 4
      %s110 = int_to_ptr.vmem [resolvable:$true] %s109
      %112 = dma.vmem_to_hbm [thread:$0]  %s110, 128, %s3, [#allocation6]
    $region25: #{tpu_custom_call.1} parent=1 // pred_fallthru
      _
    // Predicated region
    $region26: #{tpu_custom_call.1} parent=1 // pred_check
      _
    $region27: #{tpu_custom_call.1} parent=1 // pred_check_branch
      %114 = sbr.rel (0) target = $region29
    $region28: #{tpu_custom_call.1} parent=1 // pred_region
      %115 = dma.done [#allocation6], 128
    $region29: #{tpu_custom_call.1} parent=1 // pred_fallthru
      _
    %116 = vsyncpa [#allocation6], 1

</llo_original>
